<compile_context>
chip_gen: v7x
topology: tpu7x:2x2x1
jax: 0.10.0
libtpu: 0.0.40
codegen_flags: <defaults>
</compile_context>

<pallas_src>
import jax
import jax.numpy as jnp
from jax.experimental import pallas as pl
from jax.experimental.pallas import tpu as pltpu

NUM_INPUTS = 250
NUM_HIDDEN = 64
NUM_OUTPUTS = 3
NUM_STEPS = 10
BETA = 0.9
THRESHOLD = 1.0

H_PAD = 128     # hidden lanes padded 64 -> 128: lane-dense spike-stack stores/reload
OUT_PAD = 8     # output lanes padded 3 -> 8: tiny HBM writeback, wrapper slices to 3
TB_CAP = 512    # batch-tile cap (sublane block dims are not limited to 128)


def _round_up(x, m):
    return (x + m - 1) // m * m


def _choose_tile(batch):
    """Return (tile_rows, padded_batch). Tiles are multiples of 8; batches above the
    cap are split into >= 2 roughly equal tiles so the parallel grid axis can shard
    across both v7x TensorCores."""
    b8 = _round_up(batch, 8)
    if b8 <= TB_CAP:
        return b8, b8
    n_tiles = max(2, -(-b8 // TB_CAP))
    tb = _round_up(-(-b8 // n_tiles), 8)
    return tb, _round_up(b8, tb)


def snn_kernel(x_ref, w1_ref, b1_ref, w2_ref, b2_ref, out_ref, spk_ref):
    """Two-phase SNN forward on one (TB, ...) batch tile."""
    tb = out_ref.shape[0]

    x = x_ref[...]           # (TB, 250)
    w1 = w1_ref[...]         # (250, H_PAD)   zero-padded past NUM_HIDDEN
    b1 = b1_ref[...]         # (1, H_PAD)     zero-padded past NUM_HIDDEN
    w2 = w2_ref[...]         # (H_PAD, OUT_PAD) zero-padded rows/cols
    b2 = b2_ref[...]         # (1, OUT_PAD)   zero-padded past NUM_OUTPUTS

    # fc1(x) is identical at every time step -> single MXU pass (Mosaic pads K=250).
    cur1 = jnp.dot(x, w1, preferred_element_type=jnp.float32) + b1   # (TB, H_PAD)

    # ---- Phase 1: LIF1 recurrence (VPU only), fully unrolled; stack spk1 steps. ----
    # reset_t == spk_{t-1} (same threshold for reset and fire), so reuse the spike.
    mem1 = jnp.zeros((tb, H_PAD), jnp.float32)
    spk1 = jnp.zeros((tb, H_PAD), jnp.float32)
    for step in range(NUM_STEPS):
        mem1 = BETA * mem1 + cur1 - spk1 * THRESHOLD
        spk1 = (mem1 > THRESHOLD).astype(jnp.float32)
        spk_ref[pl.ds(step * tb, tb), :] = spk1          # lane-dense (TB, 128) store

    # ---- Single layer-2 matmul over the whole spike stack (bias folded in once). ----
    spk_all = spk_ref[...]                                                    # (S*TB, H_PAD)
    cur2_all = jnp.dot(spk_all, w2, preferred_element_type=jnp.float32) + b2  # (S*TB, OUT_PAD)

    # ---- Phase 2: LIF2 recurrence + spike-count accumulation. ----
    mem2 = jnp.zeros((tb, OUT_PAD), jnp.float32)
    spk2 = jnp.zeros((tb, OUT_PAD), jnp.float32)
    acc = jnp.zeros((tb, OUT_PAD), jnp.float32)
    for step in range(NUM_STEPS):
        cur2 = cur2_all[step * tb:(step + 1) * tb, :]    # static, sublane-aligned slice
        mem2 = BETA * mem2 + cur2 - spk2 * THRESHOLD
        spk2 = (mem2 > THRESHOLD).astype(jnp.float32)
        acc = acc + spk2

    out_ref[...] = acc   # (TB, 8) store; wrapper slices to NUM_OUTPUTS


def prepare_params(w1, b1, w2, b2):
    """One-time (out-of-jit) zero-padding of weights: hidden 64->128, outputs 3->8."""
    w1p = jnp.zeros((NUM_INPUTS, H_PAD), jnp.float32).at[:, :NUM_HIDDEN].set(w1)
    b1p = jnp.zeros((1, H_PAD), jnp.float32).at[:, :NUM_HIDDEN].set(
        jnp.reshape(b1, (1, NUM_HIDDEN)))
    w2p = jnp.zeros((H_PAD, OUT_PAD), jnp.float32).at[:NUM_HIDDEN, :NUM_OUTPUTS].set(w2)
    b2p = jnp.zeros((1, OUT_PAD), jnp.float32).at[:, :NUM_OUTPUTS].set(
        jnp.reshape(b2, (1, NUM_OUTPUTS)))
    return w1p, b1p, w2p, b2p


@jax.jit
def snn_forward(x, w1p, b1p, w2p, b2p):
    """x: (B, 250) f32; padded params from prepare_params(). Returns (B, 3) counts."""
    batch = x.shape[0]
    tb, b_pad = _choose_tile(batch)

    # Only pad the batch dim (and only when needed); x is otherwise passed unpadded.
    xp = x if b_pad == batch else jnp.pad(x, ((0, b_pad - batch), (0, 0)))

    out_padded = pl.pallas_call(
        snn_kernel,
        out_shape=jax.ShapeDtypeStruct((b_pad, OUT_PAD), jnp.float32),
        grid_spec=pltpu.PrefetchScalarGridSpec(
            num_scalar_prefetch=0,
            grid=(b_pad // tb,),
            in_specs=[
                pl.BlockSpec((tb, NUM_INPUTS), lambda i: (i, 0)),
                pl.BlockSpec((NUM_INPUTS, H_PAD), lambda i: (0, 0)),
                pl.BlockSpec((1, H_PAD), lambda i: (0, 0)),
                pl.BlockSpec((H_PAD, OUT_PAD), lambda i: (0, 0)),
                pl.BlockSpec((1, OUT_PAD), lambda i: (0, 0)),
            ],
            out_specs=pl.BlockSpec((tb, OUT_PAD), lambda i: (i, 0)),
            scratch_shapes=[pltpu.VMEM((NUM_STEPS * tb, H_PAD), jnp.float32)],
        ),
        compiler_params=pltpu.CompilerParams(dimension_semantics=("parallel",)),
    )(xp, w1p, b1p, w2p, b2p)

    return out_padded[:batch, :NUM_OUTPUTS]


def init_params(key):
    """Deterministic init mimicking nn.Linear defaults: U(-1/sqrt(fan_in), 1/sqrt(fan_in))."""
    k1, k2, k3, k4 = jax.random.split(key, 4)
    bound1 = 1.0 / (NUM_INPUTS ** 0.5)
    bound2 = 1.0 / (NUM_HIDDEN ** 0.5)
    w1 = jax.random.uniform(k1, (NUM_INPUTS, NUM_HIDDEN), jnp.float32, -bound1, bound1)
    b1 = jax.random.uniform(k2, (1, NUM_HIDDEN), jnp.float32, -bound1, bound1)
    w2 = jax.random.uniform(k3, (NUM_HIDDEN, NUM_OUTPUTS), jnp.float32, -bound2, bound2)
    b2 = jax.random.uniform(k4, (1, NUM_OUTPUTS), jnp.float32, -bound2, bound2)
    return w1, b1, w2, b2


def snn_reference(x, w1, b1, w2, b2):
    """Pure-JAX reference mirroring the PyTorch loop literally."""
    mem1 = jnp.zeros((x.shape[0], NUM_HIDDEN), jnp.float32)
    mem2 = jnp.zeros((x.shape[0], NUM_OUTPUTS), jnp.float32)
    acc = jnp.zeros((x.shape[0], NUM_OUTPUTS), jnp.float32)
    for _ in range(NUM_STEPS):
        cur1 = x @ w1 + b1
        reset1 = (mem1 > THRESHOLD).astype(jnp.float32)
        mem1 = BETA * mem1 + cur1 - reset1 * THRESHOLD
        spk1 = (mem1 > THRESHOLD).astype(jnp.float32)
        cur2 = spk1 @ w2 + b2
        reset2 = (mem2 > THRESHOLD).astype(jnp.float32)
        mem2 = BETA * mem2 + cur2 - reset2 * THRESHOLD
        spk2 = (mem2 > THRESHOLD).astype(jnp.float32)
        acc = acc + spk2
    return acc


if __name__ == "__main__":
    key = jax.random.PRNGKey(0)
    k_x, k_p = jax.random.split(key)

    w1, b1, w2, b2 = init_params(k_p)
    w1p, b1p, w2p, b2p = prepare_params(w1, b1, w2, b2)

    # Small test batch; scale inputs so membrane potentials actually cross threshold.
    batch = 8
    x = jax.random.normal(k_x, (batch, NUM_INPUTS), jnp.float32) * 2.0
    out = jax.block_until_ready(snn_forward(x, w1p, b1p, w2p, b2p))
    ref = snn_reference(x, w1, b1, w2, b2)
    assert out.shape == (batch, NUM_OUTPUTS)
    assert jnp.allclose(out, ref, atol=1e-5), (out, ref)

    # Non-multiple-of-8 batch exercises the batch-padding + slice path.
    batch2 = 20
    x2 = jax.random.normal(jax.random.PRNGKey(1), (batch2, NUM_INPUTS), jnp.float32) * 2.0
    out2 = jax.block_until_ready(snn_forward(x2, w1p, b1p, w2p, b2p))
    ref2 = snn_reference(x2, w1, b1, w2, b2)
    assert out2.shape == (batch2, NUM_OUTPUTS)
    assert jnp.allclose(out2, ref2, atol=1e-5), (out2, ref2)

    print("KERNEL_OK")
</pallas_src>

<mosaic_0001>
module attributes {stable_mosaic.version = 11 : i64} {
  func.func @snn_kernel(%arg0: i32, %arg1: memref<8x250xf32, #tpu.memory_space<vmem>>, %arg2: memref<250x128xf32, #tpu.memory_space<vmem>>, %arg3: memref<1x128xf32, #tpu.memory_space<vmem>>, %arg4: memref<128x8xf32, #tpu.memory_space<vmem>>, %arg5: memref<1x8xf32, #tpu.memory_space<vmem>>, %arg6: memref<8x8xf32, #tpu.memory_space<vmem>>, %arg7: memref<80x128xf32, #tpu.memory_space<vmem>>) attributes {dimension_semantics = [#tpu.dimension_semantics<parallel>], iteration_bounds = array<i64: 1>, scalar_prefetch = 0 : i64, scratch_operands = 1 : i64, tpu.core_type = #tpu.core_type<tc>, window_params = [{transform_indices = @transform_0, window_bounds = array<i64: 8, 250>}, {pipeline_mode = #tpu.pipeline_mode<synchronous>, transform_indices = @transform_1, window_bounds = array<i64: 250, 128>}, {pipeline_mode = #tpu.pipeline_mode<synchronous>, transform_indices = @transform_2, window_bounds = array<i64: 1, 128>}, {pipeline_mode = #tpu.pipeline_mode<synchronous>, transform_indices = @transform_3, window_bounds = array<i64: 128, 8>}, {pipeline_mode = #tpu.pipeline_mode<synchronous>, transform_indices = @transform_4, window_bounds = array<i64: 1, 8>}, {transform_indices = @transform_5, window_bounds = array<i64: 8, 8>}]} {
    %c0 = arith.constant 0 : index
    %c0_0 = arith.constant 0 : index
    %0 = vector.load %arg1[%c0, %c0_0] : memref<8x250xf32, #tpu.memory_space<vmem>>, vector<8x250xf32>
    %c0_1 = arith.constant 0 : index
    %c0_2 = arith.constant 0 : index
    %1 = vector.load %arg2[%c0_1, %c0_2] : memref<250x128xf32, #tpu.memory_space<vmem>>, vector<250x128xf32>
    %c0_3 = arith.constant 0 : index
    %c0_4 = arith.constant 0 : index
    %2 = vector.load %arg3[%c0_3, %c0_4] : memref<1x128xf32, #tpu.memory_space<vmem>>, vector<1x128xf32>
    %c0_5 = arith.constant 0 : index
    %c0_6 = arith.constant 0 : index
    %3 = vector.load %arg4[%c0_5, %c0_6] : memref<128x8xf32, #tpu.memory_space<vmem>>, vector<128x8xf32>
    %c0_7 = arith.constant 0 : index
    %c0_8 = arith.constant 0 : index
    %4 = vector.load %arg5[%c0_7, %c0_8] : memref<1x8xf32, #tpu.memory_space<vmem>>, vector<1x8xf32>
    %cst = arith.constant dense<0.000000e+00> : vector<8x128xf32>
    %5 = tpu.matmul %0, %1, %cst {dimension_numbers = #tpu.dot_dimension_numbers<[1], [0], [0], [1], [0, 0, 1, 1], [], []>} : vector<8x250xf32>, vector<250x128xf32>, vector<8x128xf32> -> vector<8x128xf32>
    %6 = vector.broadcast %2 : vector<1x128xf32> to vector<8x128xf32>
    %7 = arith.addf %5, %6 : vector<8x128xf32>
    %cst_9 = arith.constant 0.000000e+00 : f32
    %8 = vector.broadcast %cst_9 : f32 to vector<8x128xf32>
    %cst_10 = arith.constant 0.000000e+00 : f32
    %9 = vector.broadcast %cst_10 : f32 to vector<8x128xf32>
    %cst_11 = arith.constant 0.899999976 : f32
    %10 = vector.broadcast %cst_11 : f32 to vector<8x128xf32>
    %11 = arith.mulf %10, %8 : vector<8x128xf32>
    %12 = arith.addf %11, %7 : vector<8x128xf32>
    %cst_12 = arith.constant 1.000000e+00 : f32
    %13 = vector.broadcast %cst_12 : f32 to vector<8x128xf32>
    %14 = arith.mulf %9, %13 : vector<8x128xf32>
    %15 = arith.subf %12, %14 : vector<8x128xf32>
    %cst_13 = arith.constant 1.000000e+00 : f32
    %16 = vector.broadcast %cst_13 : f32 to vector<8x128xf32>
    %17 = arith.cmpf ogt, %15, %16 : vector<8x128xf32>
    %18 = arith.extui %17 : vector<8x128xi1> to vector<8x128xi32>
    %19 = arith.sitofp %18 : vector<8x128xi32> to vector<8x128xf32>
    %c0_14 = arith.constant 0 : index
    %c0_15 = arith.constant 0 : index
    %20 = vector.load %arg7[%c0_14, %c0_15] : memref<80x128xf32, #tpu.memory_space<vmem>>, vector<8x128xf32>
    tpu.vector_store %arg7[%c0_14, %c0_15], %19 {strides = array<i32>} : memref<80x128xf32, #tpu.memory_space<vmem>>, vector<8x128xf32>,
    %cst_16 = arith.constant 0.899999976 : f32
    %21 = vector.broadcast %cst_16 : f32 to vector<8x128xf32>
    %22 = arith.mulf %21, %15 : vector<8x128xf32>
    %23 = arith.addf %22, %7 : vector<8x128xf32>
    %cst_17 = arith.constant 1.000000e+00 : f32
    %24 = vector.broadcast %cst_17 : f32 to vector<8x128xf32>
    %25 = arith.mulf %19, %24 : vector<8x128xf32>
    %26 = arith.subf %23, %25 : vector<8x128xf32>
    %cst_18 = arith.constant 1.000000e+00 : f32
    %27 = vector.broadcast %cst_18 : f32 to vector<8x128xf32>
    %28 = arith.cmpf ogt, %26, %27 : vector<8x128xf32>
    %29 = arith.extui %28 : vector<8x128xi1> to vector<8x128xi32>
    %30 = arith.sitofp %29 : vector<8x128xi32> to vector<8x128xf32>
    %c8 = arith.constant 8 : index
    %c0_19 = arith.constant 0 : index
    %31 = vector.load %arg7[%c8, %c0_19] : memref<80x128xf32, #tpu.memory_space<vmem>>, vector<8x128xf32>
    tpu.vector_store %arg7[%c8, %c0_19], %30 {strides = array<i32>} : memref<80x128xf32, #tpu.memory_space<vmem>>, vector<8x128xf32>,
    %cst_20 = arith.constant 0.899999976 : f32
    %32 = vector.broadcast %cst_20 : f32 to vector<8x128xf32>
    %33 = arith.mulf %32, %26 : vector<8x128xf32>
    %34 = arith.addf %33, %7 : vector<8x128xf32>
    %cst_21 = arith.constant 1.000000e+00 : f32
    %35 = vector.broadcast %cst_21 : f32 to vector<8x128xf32>
    %36 = arith.mulf %30, %35 : vector<8x128xf32>
    %37 = arith.subf %34, %36 : vector<8x128xf32>
    %cst_22 = arith.constant 1.000000e+00 : f32
    %38 = vector.broadcast %cst_22 : f32 to vector<8x128xf32>
    %39 = arith.cmpf ogt, %37, %38 : vector<8x128xf32>
    %40 = arith.extui %39 : vector<8x128xi1> to vector<8x128xi32>
    %41 = arith.sitofp %40 : vector<8x128xi32> to vector<8x128xf32>
    %c16 = arith.constant 16 : index
    %c0_23 = arith.constant 0 : index
    %42 = vector.load %arg7[%c16, %c0_23] : memref<80x128xf32, #tpu.memory_space<vmem>>, vector<8x128xf32>
    tpu.vector_store %arg7[%c16, %c0_23], %41 {strides = array<i32>} : memref<80x128xf32, #tpu.memory_space<vmem>>, vector<8x128xf32>,
    %cst_24 = arith.constant 0.899999976 : f32
    %43 = vector.broadcast %cst_24 : f32 to vector<8x128xf32>
    %44 = arith.mulf %43, %37 : vector<8x128xf32>
    %45 = arith.addf %44, %7 : vector<8x128xf32>
    %cst_25 = arith.constant 1.000000e+00 : f32
    %46 = vector.broadcast %cst_25 : f32 to vector<8x128xf32>
    %47 = arith.mulf %41, %46 : vector<8x128xf32>
    %48 = arith.subf %45, %47 : vector<8x128xf32>
    %cst_26 = arith.constant 1.000000e+00 : f32
    %49 = vector.broadcast %cst_26 : f32 to vector<8x128xf32>
    %50 = arith.cmpf ogt, %48, %49 : vector<8x128xf32>
    %51 = arith.extui %50 : vector<8x128xi1> to vector<8x128xi32>
    %52 = arith.sitofp %51 : vector<8x128xi32> to vector<8x128xf32>
    %c24 = arith.constant 24 : index
    %c0_27 = arith.constant 0 : index
    %53 = vector.load %arg7[%c24, %c0_27] : memref<80x128xf32, #tpu.memory_space<vmem>>, vector<8x128xf32>
    tpu.vector_store %arg7[%c24, %c0_27], %52 {strides = array<i32>} : memref<80x128xf32, #tpu.memory_space<vmem>>, vector<8x128xf32>,
    %cst_28 = arith.constant 0.899999976 : f32
    %54 = vector.broadcast %cst_28 : f32 to vector<8x128xf32>
    %55 = arith.mulf %54, %48 : vector<8x128xf32>
    %56 = arith.addf %55, %7 : vector<8x128xf32>
    %cst_29 = arith.constant 1.000000e+00 : f32
    %57 = vector.broadcast %cst_29 : f32 to vector<8x128xf32>
    %58 = arith.mulf %52, %57 : vector<8x128xf32>
    %59 = arith.subf %56, %58 : vector<8x128xf32>
    %cst_30 = arith.constant 1.000000e+00 : f32
    %60 = vector.broadcast %cst_30 : f32 to vector<8x128xf32>
    %61 = arith.cmpf ogt, %59, %60 : vector<8x128xf32>
    %62 = arith.extui %61 : vector<8x128xi1> to vector<8x128xi32>
    %63 = arith.sitofp %62 : vector<8x128xi32> to vector<8x128xf32>
    %c32 = arith.constant 32 : index
    %c0_31 = arith.constant 0 : index
    %64 = vector.load %arg7[%c32, %c0_31] : memref<80x128xf32, #tpu.memory_space<vmem>>, vector<8x128xf32>
    tpu.vector_store %arg7[%c32, %c0_31], %63 {strides = array<i32>} : memref<80x128xf32, #tpu.memory_space<vmem>>, vector<8x128xf32>,
    %cst_32 = arith.constant 0.899999976 : f32
    %65 = vector.broadcast %cst_32 : f32 to vector<8x128xf32>
    %66 = arith.mulf %65, %59 : vector<8x128xf32>
    %67 = arith.addf %66, %7 : vector<8x128xf32>
    %cst_33 = arith.constant 1.000000e+00 : f32
    %68 = vector.broadcast %cst_33 : f32 to vector<8x128xf32>
    %69 = arith.mulf %63, %68 : vector<8x128xf32>
    %70 = arith.subf %67, %69 : vector<8x128xf32>
    %cst_34 = arith.constant 1.000000e+00 : f32
    %71 = vector.broadcast %cst_34 : f32 to vector<8x128xf32>
    %72 = arith.cmpf ogt, %70, %71 : vector<8x128xf32>
    %73 = arith.extui %72 : vector<8x128xi1> to vector<8x128xi32>
    %74 = arith.sitofp %73 : vector<8x128xi32> to vector<8x128xf32>
    %c40 = arith.constant 40 : index
    %c0_35 = arith.constant 0 : index
    %75 = vector.load %arg7[%c40, %c0_35] : memref<80x128xf32, #tpu.memory_space<vmem>>, vector<8x128xf32>
    tpu.vector_store %arg7[%c40, %c0_35], %74 {strides = array<i32>} : memref<80x128xf32, #tpu.memory_space<vmem>>, vector<8x128xf32>,
    %cst_36 = arith.constant 0.899999976 : f32
    %76 = vector.broadcast %cst_36 : f32 to vector<8x128xf32>
    %77 = arith.mulf %76, %70 : vector<8x128xf32>
    %78 = arith.addf %77, %7 : vector<8x128xf32>
    %cst_37 = arith.constant 1.000000e+00 : f32
    %79 = vector.broadcast %cst_37 : f32 to vector<8x128xf32>
    %80 = arith.mulf %74, %79 : vector<8x128xf32>
    %81 = arith.subf %78, %80 : vector<8x128xf32>
    %cst_38 = arith.constant 1.000000e+00 : f32
    %82 = vector.broadcast %cst_38 : f32 to vector<8x128xf32>
    %83 = arith.cmpf ogt, %81, %82 : vector<8x128xf32>
    %84 = arith.extui %83 : vector<8x128xi1> to vector<8x128xi32>
    %85 = arith.sitofp %84 : vector<8x128xi32> to vector<8x128xf32>
    %c48 = arith.constant 48 : index
    %c0_39 = arith.constant 0 : index
    %86 = vector.load %arg7[%c48, %c0_39] : memref<80x128xf32, #tpu.memory_space<vmem>>, vector<8x128xf32>
    tpu.vector_store %arg7[%c48, %c0_39], %85 {strides = array<i32>} : memref<80x128xf32, #tpu.memory_space<vmem>>, vector<8x128xf32>,
    %cst_40 = arith.constant 0.899999976 : f32
    %87 = vector.broadcast %cst_40 : f32 to vector<8x128xf32>
    %88 = arith.mulf %87, %81 : vector<8x128xf32>
    %89 = arith.addf %88, %7 : vector<8x128xf32>
    %cst_41 = arith.constant 1.000000e+00 : f32
    %90 = vector.broadcast %cst_41 : f32 to vector<8x128xf32>
    %91 = arith.mulf %85, %90 : vector<8x128xf32>
    %92 = arith.subf %89, %91 : vector<8x128xf32>
    %cst_42 = arith.constant 1.000000e+00 : f32
    %93 = vector.broadcast %cst_42 : f32 to vector<8x128xf32>
    %94 = arith.cmpf ogt, %92, %93 : vector<8x128xf32>
    %95 = arith.extui %94 : vector<8x128xi1> to vector<8x128xi32>
    %96 = arith.sitofp %95 : vector<8x128xi32> to vector<8x128xf32>
    %c56 = arith.constant 56 : index
    %c0_43 = arith.constant 0 : index
    %97 = vector.load %arg7[%c56, %c0_43] : memref<80x128xf32, #tpu.memory_space<vmem>>, vector<8x128xf32>
    tpu.vector_store %arg7[%c56, %c0_43], %96 {strides = array<i32>} : memref<80x128xf32, #tpu.memory_space<vmem>>, vector<8x128xf32>,
    %cst_44 = arith.constant 0.899999976 : f32
    %98 = vector.broadcast %cst_44 : f32 to vector<8x128xf32>
    %99 = arith.mulf %98, %92 : vector<8x128xf32>
    %100 = arith.addf %99, %7 : vector<8x128xf32>
    %cst_45 = arith.constant 1.000000e+00 : f32
    %101 = vector.broadcast %cst_45 : f32 to vector<8x128xf32>
    %102 = arith.mulf %96, %101 : vector<8x128xf32>
    %103 = arith.subf %100, %102 : vector<8x128xf32>
    %cst_46 = arith.constant 1.000000e+00 : f32
    %104 = vector.broadcast %cst_46 : f32 to vector<8x128xf32>
    %105 = arith.cmpf ogt, %103, %104 : vector<8x128xf32>
    %106 = arith.extui %105 : vector<8x128xi1> to vector<8x128xi32>
    %107 = arith.sitofp %106 : vector<8x128xi32> to vector<8x128xf32>
    %c64 = arith.constant 64 : index
    %c0_47 = arith.constant 0 : index
    %108 = vector.load %arg7[%c64, %c0_47] : memref<80x128xf32, #tpu.memory_space<vmem>>, vector<8x128xf32>
    tpu.vector_store %arg7[%c64, %c0_47], %107 {strides = array<i32>} : memref<80x128xf32, #tpu.memory_space<vmem>>, vector<8x128xf32>,
    %cst_48 = arith.constant 0.899999976 : f32
    %109 = vector.broadcast %cst_48 : f32 to vector<8x128xf32>
    %110 = arith.mulf %109, %103 : vector<8x128xf32>
    %111 = arith.addf %110, %7 : vector<8x128xf32>
    %cst_49 = arith.constant 1.000000e+00 : f32
    %112 = vector.broadcast %cst_49 : f32 to vector<8x128xf32>
    %113 = arith.mulf %107, %112 : vector<8x128xf32>
    %114 = arith.subf %111, %113 : vector<8x128xf32>
    %cst_50 = arith.constant 1.000000e+00 : f32
    %115 = vector.broadcast %cst_50 : f32 to vector<8x128xf32>
    %116 = arith.cmpf ogt, %114, %115 : vector<8x128xf32>
    %117 = arith.extui %116 : vector<8x128xi1> to vector<8x128xi32>
    %118 = arith.sitofp %117 : vector<8x128xi32> to vector<8x128xf32>
    %c72 = arith.constant 72 : index
    %c0_51 = arith.constant 0 : index
    %119 = vector.load %arg7[%c72, %c0_51] : memref<80x128xf32, #tpu.memory_space<vmem>>, vector<8x128xf32>
    tpu.vector_store %arg7[%c72, %c0_51], %118 {strides = array<i32>} : memref<80x128xf32, #tpu.memory_space<vmem>>, vector<8x128xf32>,
    %c0_52 = arith.constant 0 : index
    %c0_53 = arith.constant 0 : index
    %120 = vector.load %arg7[%c0_52, %c0_53] : memref<80x128xf32, #tpu.memory_space<vmem>>, vector<80x128xf32>
    %cst_54 = arith.constant dense<0.000000e+00> : vector<80x8xf32>
    %121 = tpu.matmul %120, %3, %cst_54 {dimension_numbers = #tpu.dot_dimension_numbers<[1], [0], [0], [1], [0, 0, 1, 1], [], []>} : vector<80x128xf32>, vector<128x8xf32>, vector<80x8xf32> -> vector<80x8xf32>
    %122 = vector.broadcast %4 : vector<1x8xf32> to vector<80x8xf32>
    %123 = arith.addf %121, %122 : vector<80x8xf32>
    %cst_55 = arith.constant 0.000000e+00 : f32
    %124 = vector.broadcast %cst_55 : f32 to vector<8x8xf32>
    %cst_56 = arith.constant 0.000000e+00 : f32
    %125 = vector.broadcast %cst_56 : f32 to vector<8x8xf32>
    %cst_57 = arith.constant 0.000000e+00 : f32
    %126 = vector.broadcast %cst_57 : f32 to vector<8x8xf32>
    %127 = vector.extract_strided_slice %123 {offsets = [0, 0], sizes = [8, 8], strides = [1, 1]} : vector<80x8xf32> to vector<8x8xf32>
    %cst_58 = arith.constant 0.899999976 : f32
    %128 = vector.broadcast %cst_58 : f32 to vector<8x8xf32>
    %129 = arith.mulf %128, %124 : vector<8x8xf32>
    %130 = arith.addf %129, %127 : vector<8x8xf32>
    %cst_59 = arith.constant 1.000000e+00 : f32
    %131 = vector.broadcast %cst_59 : f32 to vector<8x8xf32>
    %132 = arith.mulf %125, %131 : vector<8x8xf32>
    %133 = arith.subf %130, %132 : vector<8x8xf32>
    %cst_60 = arith.constant 1.000000e+00 : f32
    %134 = vector.broadcast %cst_60 : f32 to vector<8x8xf32>
    %135 = arith.cmpf ogt, %133, %134 : vector<8x8xf32>
    %136 = arith.extui %135 : vector<8x8xi1> to vector<8x8xi32>
    %137 = arith.sitofp %136 : vector<8x8xi32> to vector<8x8xf32>
    %138 = arith.addf %126, %137 : vector<8x8xf32>
    %139 = vector.extract_strided_slice %123 {offsets = [8, 0], sizes = [8, 8], strides = [1, 1]} : vector<80x8xf32> to vector<8x8xf32>
    %cst_61 = arith.constant 0.899999976 : f32
    %140 = vector.broadcast %cst_61 : f32 to vector<8x8xf32>
    %141 = arith.mulf %140, %133 : vector<8x8xf32>
    %142 = arith.addf %141, %139 : vector<8x8xf32>
    %cst_62 = arith.constant 1.000000e+00 : f32
    %143 = vector.broadcast %cst_62 : f32 to vector<8x8xf32>
    %144 = arith.mulf %137, %143 : vector<8x8xf32>
    %145 = arith.subf %142, %144 : vector<8x8xf32>
    %cst_63 = arith.constant 1.000000e+00 : f32
    %146 = vector.broadcast %cst_63 : f32 to vector<8x8xf32>
    %147 = arith.cmpf ogt, %145, %146 : vector<8x8xf32>
    %148 = arith.extui %147 : vector<8x8xi1> to vector<8x8xi32>
    %149 = arith.sitofp %148 : vector<8x8xi32> to vector<8x8xf32>
    %150 = arith.addf %138, %149 : vector<8x8xf32>
    %151 = vector.extract_strided_slice %123 {offsets = [16, 0], sizes = [8, 8], strides = [1, 1]} : vector<80x8xf32> to vector<8x8xf32>
    %cst_64 = arith.constant 0.899999976 : f32
    %152 = vector.broadcast %cst_64 : f32 to vector<8x8xf32>
    %153 = arith.mulf %152, %145 : vector<8x8xf32>
    %154 = arith.addf %153, %151 : vector<8x8xf32>
    %cst_65 = arith.constant 1.000000e+00 : f32
    %155 = vector.broadcast %cst_65 : f32 to vector<8x8xf32>
    %156 = arith.mulf %149, %155 : vector<8x8xf32>
    %157 = arith.subf %154, %156 : vector<8x8xf32>
    %cst_66 = arith.constant 1.000000e+00 : f32
    %158 = vector.broadcast %cst_66 : f32 to vector<8x8xf32>
    %159 = arith.cmpf ogt, %157, %158 : vector<8x8xf32>
    %160 = arith.extui %159 : vector<8x8xi1> to vector<8x8xi32>
    %161 = arith.sitofp %160 : vector<8x8xi32> to vector<8x8xf32>
    %162 = arith.addf %150, %161 : vector<8x8xf32>
    %163 = vector.extract_strided_slice %123 {offsets = [24, 0], sizes = [8, 8], strides = [1, 1]} : vector<80x8xf32> to vector<8x8xf32>
    %cst_67 = arith.constant 0.899999976 : f32
    %164 = vector.broadcast %cst_67 : f32 to vector<8x8xf32>
    %165 = arith.mulf %164, %157 : vector<8x8xf32>
    %166 = arith.addf %165, %163 : vector<8x8xf32>
    %cst_68 = arith.constant 1.000000e+00 : f32
    %167 = vector.broadcast %cst_68 : f32 to vector<8x8xf32>
    %168 = arith.mulf %161, %167 : vector<8x8xf32>
    %169 = arith.subf %166, %168 : vector<8x8xf32>
    %cst_69 = arith.constant 1.000000e+00 : f32
    %170 = vector.broadcast %cst_69 : f32 to vector<8x8xf32>
    %171 = arith.cmpf ogt, %169, %170 : vector<8x8xf32>
    %172 = arith.extui %171 : vector<8x8xi1> to vector<8x8xi32>
    %173 = arith.sitofp %172 : vector<8x8xi32> to vector<8x8xf32>
    %174 = arith.addf %162, %173 : vector<8x8xf32>
    %175 = vector.extract_strided_slice %123 {offsets = [32, 0], sizes = [8, 8], strides = [1, 1]} : vector<80x8xf32> to vector<8x8xf32>
    %cst_70 = arith.constant 0.899999976 : f32
    %176 = vector.broadcast %cst_70 : f32 to vector<8x8xf32>
    %177 = arith.mulf %176, %169 : vector<8x8xf32>
    %178 = arith.addf %177, %175 : vector<8x8xf32>
    %cst_71 = arith.constant 1.000000e+00 : f32
    %179 = vector.broadcast %cst_71 : f32 to vector<8x8xf32>
    %180 = arith.mulf %173, %179 : vector<8x8xf32>
    %181 = arith.subf %178, %180 : vector<8x8xf32>
    %cst_72 = arith.constant 1.000000e+00 : f32
    %182 = vector.broadcast %cst_72 : f32 to vector<8x8xf32>
    %183 = arith.cmpf ogt, %181, %182 : vector<8x8xf32>
    %184 = arith.extui %183 : vector<8x8xi1> to vector<8x8xi32>
    %185 = arith.sitofp %184 : vector<8x8xi32> to vector<8x8xf32>
    %186 = arith.addf %174, %185 : vector<8x8xf32>
    %187 = vector.extract_strided_slice %123 {offsets = [40, 0], sizes = [8, 8], strides = [1, 1]} : vector<80x8xf32> to vector<8x8xf32>
    %cst_73 = arith.constant 0.899999976 : f32
    %188 = vector.broadcast %cst_73 : f32 to vector<8x8xf32>
    %189 = arith.mulf %188, %181 : vector<8x8xf32>
    %190 = arith.addf %189, %187 : vector<8x8xf32>
    %cst_74 = arith.constant 1.000000e+00 : f32
    %191 = vector.broadcast %cst_74 : f32 to vector<8x8xf32>
    %192 = arith.mulf %185, %191 : vector<8x8xf32>
    %193 = arith.subf %190, %192 : vector<8x8xf32>
    %cst_75 = arith.constant 1.000000e+00 : f32
    %194 = vector.broadcast %cst_75 : f32 to vector<8x8xf32>
    %195 = arith.cmpf ogt, %193, %194 : vector<8x8xf32>
    %196 = arith.extui %195 : vector<8x8xi1> to vector<8x8xi32>
    %197 = arith.sitofp %196 : vector<8x8xi32> to vector<8x8xf32>
    %198 = arith.addf %186, %197 : vector<8x8xf32>
    %199 = vector.extract_strided_slice %123 {offsets = [48, 0], sizes = [8, 8], strides = [1, 1]} : vector<80x8xf32> to vector<8x8xf32>
    %cst_76 = arith.constant 0.899999976 : f32
    %200 = vector.broadcast %cst_76 : f32 to vector<8x8xf32>
    %201 = arith.mulf %200, %193 : vector<8x8xf32>
    %202 = arith.addf %201, %199 : vector<8x8xf32>
    %cst_77 = arith.constant 1.000000e+00 : f32
    %203 = vector.broadcast %cst_77 : f32 to vector<8x8xf32>
    %204 = arith.mulf %197, %203 : vector<8x8xf32>
    %205 = arith.subf %202, %204 : vector<8x8xf32>
    %cst_78 = arith.constant 1.000000e+00 : f32
    %206 = vector.broadcast %cst_78 : f32 to vector<8x8xf32>
    %207 = arith.cmpf ogt, %205, %206 : vector<8x8xf32>
    %208 = arith.extui %207 : vector<8x8xi1> to vector<8x8xi32>
    %209 = arith.sitofp %208 : vector<8x8xi32> to vector<8x8xf32>
    %210 = arith.addf %198, %209 : vector<8x8xf32>
    %211 = vector.extract_strided_slice %123 {offsets = [56, 0], sizes = [8, 8], strides = [1, 1]} : vector<80x8xf32> to vector<8x8xf32>
    %cst_79 = arith.constant 0.899999976 : f32
    %212 = vector.broadcast %cst_79 : f32 to vector<8x8xf32>
    %213 = arith.mulf %212, %205 : vector<8x8xf32>
    %214 = arith.addf %213, %211 : vector<8x8xf32>
    %cst_80 = arith.constant 1.000000e+00 : f32
    %215 = vector.broadcast %cst_80 : f32 to vector<8x8xf32>
    %216 = arith.mulf %209, %215 : vector<8x8xf32>
    %217 = arith.subf %214, %216 : vector<8x8xf32>
    %cst_81 = arith.constant 1.000000e+00 : f32
    %218 = vector.broadcast %cst_81 : f32 to vector<8x8xf32>
    %219 = arith.cmpf ogt, %217, %218 : vector<8x8xf32>
    %220 = arith.extui %219 : vector<8x8xi1> to vector<8x8xi32>
    %221 = arith.sitofp %220 : vector<8x8xi32> to vector<8x8xf32>
    %222 = arith.addf %210, %221 : vector<8x8xf32>
    %223 = vector.extract_strided_slice %123 {offsets = [64, 0], sizes = [8, 8], strides = [1, 1]} : vector<80x8xf32> to vector<8x8xf32>
    %cst_82 = arith.constant 0.899999976 : f32
    %224 = vector.broadcast %cst_82 : f32 to vector<8x8xf32>
    %225 = arith.mulf %224, %217 : vector<8x8xf32>
    %226 = arith.addf %225, %223 : vector<8x8xf32>
    %cst_83 = arith.constant 1.000000e+00 : f32
    %227 = vector.broadcast %cst_83 : f32 to vector<8x8xf32>
    %228 = arith.mulf %221, %227 : vector<8x8xf32>
    %229 = arith.subf %226, %228 : vector<8x8xf32>
    %cst_84 = arith.constant 1.000000e+00 : f32
    %230 = vector.broadcast %cst_84 : f32 to vector<8x8xf32>
    %231 = arith.cmpf ogt, %229, %230 : vector<8x8xf32>
    %232 = arith.extui %231 : vector<8x8xi1> to vector<8x8xi32>
    %233 = arith.sitofp %232 : vector<8x8xi32> to vector<8x8xf32>
    %234 = arith.addf %222, %233 : vector<8x8xf32>
    %235 = vector.extract_strided_slice %123 {offsets = [72, 0], sizes = [8, 8], strides = [1, 1]} : vector<80x8xf32> to vector<8x8xf32>
    %cst_85 = arith.constant 0.899999976 : f32
    %236 = vector.broadcast %cst_85 : f32 to vector<8x8xf32>
    %237 = arith.mulf %236, %229 : vector<8x8xf32>
    %238 = arith.addf %237, %235 : vector<8x8xf32>
    %cst_86 = arith.constant 1.000000e+00 : f32
    %239 = vector.broadcast %cst_86 : f32 to vector<8x8xf32>
    %240 = arith.mulf %233, %239 : vector<8x8xf32>
    %241 = arith.subf %238, %240 : vector<8x8xf32>
    %cst_87 = arith.constant 1.000000e+00 : f32
    %242 = vector.broadcast %cst_87 : f32 to vector<8x8xf32>
    %243 = arith.cmpf ogt, %241, %242 : vector<8x8xf32>
    %244 = arith.extui %243 : vector<8x8xi1> to vector<8x8xi32>
    %245 = arith.sitofp %244 : vector<8x8xi32> to vector<8x8xf32>
    %246 = arith.addf %234, %245 : vector<8x8xf32>
    %c0_88 = arith.constant 0 : index
    %c0_89 = arith.constant 0 : index
    %247 = vector.load %arg6[%c0_88, %c0_89] : memref<8x8xf32, #tpu.memory_space<vmem>>, vector<8x8xf32>
    tpu.vector_store %arg6[%c0_88, %c0_89], %246 {strides = array<i32>} : memref<8x8xf32, #tpu.memory_space<vmem>>, vector<8x8xf32>,
    return
  }
  func.func @transform_0(%arg0: i32) -> (i32, i32) {
    %c0_i32 = arith.constant 0 : i32
    %c0_i32_0 = arith.constant 0 : i32
    return %arg0, %c0_i32 : i32, i32
  }
  func.func @transform_1(%arg0: i32) -> (i32, i32) {
    %c0_i32 = arith.constant 0 : i32
    %c0_i32_0 = arith.constant 0 : i32
    %c0_i32_1 = arith.constant 0 : i32
    return %c0_i32, %c0_i32_0 : i32, i32
  }
  func.func @transform_2(%arg0: i32) -> (i32, i32) {
    %c0_i32 = arith.constant 0 : i32
    %c0_i32_0 = arith.constant 0 : i32
    %c0_i32_1 = arith.constant 0 : i32
    return %c0_i32, %c0_i32_0 : i32, i32
  }
  func.func @transform_3(%arg0: i32) -> (i32, i32) {
    %c0_i32 = arith.constant 0 : i32
    %c0_i32_0 = arith.constant 0 : i32
    %c0_i32_1 = arith.constant 0 : i32
    return %c0_i32, %c0_i32_0 : i32, i32
  }
  func.func @transform_4(%arg0: i32) -> (i32, i32) {
    %c0_i32 = arith.constant 0 : i32
    %c0_i32_0 = arith.constant 0 : i32
    %c0_i32_1 = arith.constant 0 : i32
    return %c0_i32, %c0_i32_0 : i32, i32
  }
  func.func @transform_5(%arg0: i32) -> (i32, i32) {
    %c0_i32 = arith.constant 0 : i32
    %c0_i32_0 = arith.constant 0 : i32
    return %arg0, %c0_i32 : i32, i32
  }
}

</mosaic_0001>

<llo_original>
// kernel: snn_forward.1
$region0: #{snn_forward.1}
  #allocation0 [shape = 'u32[]', space=smem, size = 0x4, offset = 0x4, fixed_abs, tag = 'smem constant byte address 0x4 - core index']
  #allocation1 [shape = 'u32[144,128]{1,0:T(1,128)}', space=vmem, size = 0x12000, scoped, tag = 'internal scratch']
  #allocation2 [shape = 'f32[80,128]{1,0:T(8,128)}', space=vmem, size = 0xa000, scoped, tag = 'scratch operand']
  %s0 = inlined_call_operand.vmem [shape: f32[8,250], index: 0, kind: input, shape index: {}]
  %s1 = inlined_call_operand.hbm [shape: f32[250,128], index: 1, kind: input, shape index: {}]
  %s2 = inlined_call_operand.vmem [shape: f32[1,128], index: 2, kind: input, shape index: {}]
  %s3 = inlined_call_operand.vmem [shape: f32[128,8], index: 3, kind: input, shape index: {}]
  %s4 = inlined_call_operand.vmem [shape: f32[1,8], index: 4, kind: input, shape index: {}]
  %s5 = inlined_call_operand.vmem [shape: f32[8,8], index: 5, kind: output, shape index: {}]
  %s6 = sld [smem:[#allocation0]]
  $region34: #{snn_forward.1} parent=0
    _
  %s8 = ssub.s32 1, %s6
  %s9 = scalar_select 0, %s8, %s6
  $region1: #{snn_forward.1} parent=0
    #allocation3 [shape = 'u8[131072]{0}', space=vmem, size = 0x20000, scoped, tag = 'input window, operand 1, single buffered']
    #allocation4 [shape = 's32[1]{0}', space=sflag, size = 0x4, scoped, tag = 'scoped memory for snn_forward.1']
    %10 = vsyncpa [#allocation4], 0
    // Predicated region
    $region2: #{snn_forward.1} parent=1 // pred_check
      _
    $region3: #{snn_forward.1} parent=1 // pred_check_branch
      %12 = sbr.rel (0) target = $region5
    $region4: #{snn_forward.1} parent=1 // pred_region
      _
    $region5: #{snn_forward.1} parent=1 // pred_fallthru
      _
    // Predicated region
    $region6: #{snn_forward.1} parent=1 // pred_check
      _
    $region7: #{snn_forward.1} parent=1 // pred_check_branch
      %14 = sbr.rel (0) target = $region9
    $region8: #{snn_forward.1} parent=1 // pred_region
      %s16 = ssub.s32 4096, 4096
      %17 = vsyncadd [#allocation4], %s16
      %s18 = sshll.u32 [#allocation3], 4
      %s19 = int_to_ptr.vmem [resolvable:$true] %s18
      %24 = dma.hbm_to_vmem [thread:$0]  %s1, 4096, %s19, [#allocation4], 128, 128, 8
    $region9: #{snn_forward.1} parent=1 // pred_fallthru
      _
    // Predicated region
    $region10: #{snn_forward.1} parent=1 // pred_check
      _
    $region11: #{snn_forward.1} parent=1 // pred_check_branch
      %26 = sbr.rel (0) target = $region13
    $region12: #{snn_forward.1} parent=1 // pred_region
      _
    $region13: #{snn_forward.1} parent=1 // pred_fallthru
      _
    // Predicated region
    $region14: #{snn_forward.1} parent=1 // pred_check
      _
    $region15: #{snn_forward.1} parent=1 // pred_check_branch
      %28 = sbr.rel (0) target = $region17
    $region16: #{snn_forward.1} parent=1 // pred_region
      _
    $region17: #{snn_forward.1} parent=1 // pred_fallthru
      _
    // Predicated region
    $region18: #{snn_forward.1} parent=1 // pred_check
      _
    $region19: #{snn_forward.1} parent=1 // pred_check_branch
      %30 = sbr.rel (0) target = $region21
    $region20: #{snn_forward.1} parent=1 // pred_region
      _
    $region21: #{snn_forward.1} parent=1 // pred_fallthru
      _
    // Predicated region
    $region22: #{snn_forward.1} parent=1 // pred_check
      _
    $region23: #{snn_forward.1} parent=1 // pred_check_branch
      %32 = sbr.rel (0) target = $region25
    $region24: #{snn_forward.1} parent=1 // pred_region
      %33 = dma.done [#allocation4], 4096
    $region25: #{snn_forward.1} parent=1 // pred_fallthru
      _
    %v34 = vld [vmem:[%s0] sm:$0xff]
    %v35 = vld [vmem:[%s0 + $0x8] sm:$0xff]
    %v36 = vld [vmem:[#allocation3] sm:$0xff]
    %v37 = vld [vmem:[#allocation3 + $0x8] sm:$0xff]
    %v38 = vld [vmem:[#allocation3 + $0x10] sm:$0xff]
    %v39 = vld [vmem:[#allocation3 + $0x18] sm:$0xff]
    %v40 = vld [vmem:[#allocation3 + $0x20] sm:$0xff]
    %v41 = vld [vmem:[#allocation3 + $0x28] sm:$0xff]
    %v42 = vld [vmem:[#allocation3 + $0x30] sm:$0xff]
    %v43 = vld [vmem:[#allocation3 + $0x38] sm:$0xff]
    %v44 = vld [vmem:[#allocation3 + $0x40] sm:$0xff]
    %v45 = vld [vmem:[#allocation3 + $0x48] sm:$0xff]
    %v46 = vld [vmem:[#allocation3 + $0x50] sm:$0xff]
    %v47 = vld [vmem:[#allocation3 + $0x58] sm:$0xff]
    %v48 = vld [vmem:[#allocation3 + $0x60] sm:$0xff]
    %v49 = vld [vmem:[#allocation3 + $0x68] sm:$0xff]
    %v50 = vld [vmem:[#allocation3 + $0x70] sm:$0xff]
    %v51 = vld [vmem:[#allocation3 + $0x78] sm:$0xff]
    %v52 = vld [vmem:[#allocation3 + $0x80] sm:$0xff]
    %v53 = vld [vmem:[#allocation3 + $0x88] sm:$0xff]
    %v54 = vld [vmem:[#allocation3 + $0x90] sm:$0xff]
    %v55 = vld [vmem:[#allocation3 + $0x98] sm:$0xff]
    %v56 = vld [vmem:[#allocation3 + $0xa0] sm:$0xff]
    %v57 = vld [vmem:[#allocation3 + $0xa8] sm:$0xff]
    %v58 = vld [vmem:[#allocation3 + $0xb0] sm:$0xff]
    %v59 = vld [vmem:[#allocation3 + $0xb8] sm:$0xff]
    %v60 = vld [vmem:[#allocation3 + $0xc0] sm:$0xff]
    %v61 = vld [vmem:[#allocation3 + $0xc8] sm:$0xff]
    %v62 = vld [vmem:[#allocation3 + $0xd0] sm:$0xff]
    %v63 = vld [vmem:[#allocation3 + $0xd8] sm:$0xff]
    %v64 = vld [vmem:[#allocation3 + $0xe0] sm:$0xff]
    %v65 = vld [vmem:[#allocation3 + $0xe8] sm:$0xff]
    %v66 = vld [vmem:[#allocation3 + $0xf0] sm:$0xff]
    %v67 = vld [vmem:[#allocation3 + $0xf8] sm:$0x3]
    %v68 = vld [vmem:[%s2] sm:$0x1]
    %v69 = vld [vmem:[%s3] sm:$0xff]
    %v70 = vld [vmem:[%s3 + $0x8] sm:$0xff]
    %v71 = vld [vmem:[%s3 + $0x10] sm:$0xff]
    %v72 = vld [vmem:[%s3 + $0x18] sm:$0xff]
    %v73 = vld [vmem:[%s3 + $0x20] sm:$0xff]
    %v74 = vld [vmem:[%s3 + $0x28] sm:$0xff]
    %v75 = vld [vmem:[%s3 + $0x30] sm:$0xff]
    %v76 = vld [vmem:[%s3 + $0x38] sm:$0xff]
    %v77 = vld [vmem:[%s3 + $0x40] sm:$0xff]
    %v78 = vld [vmem:[%s3 + $0x48] sm:$0xff]
    %v79 = vld [vmem:[%s3 + $0x50] sm:$0xff]
    %v80 = vld [vmem:[%s3 + $0x58] sm:$0xff]
    %v81 = vld [vmem:[%s3 + $0x60] sm:$0xff]
    %v82 = vld [vmem:[%s3 + $0x68] sm:$0xff]
    %v83 = vld [vmem:[%s3 + $0x70] sm:$0xff]
    %v84 = vld [vmem:[%s3 + $0x78] sm:$0xff]
    %v85 = vld [vmem:[%s4] sm:$0x1]
    %v87 = vlaneseq
    %v88 = vshrl.u32 %v87, 7
    %v89 = vsub.s32 0, %v88
    %v90 = vrot.slane %v68, %v89
    %vm92 = vcmask 998400
    %v94 = vsel %vm92, %v35, 0
    %vm96 = vcmask 1041408
    %v98 = vsel %vm96, %v67, 0
    %100 = vmatprep.subr.mxu0 0.0
    %101 = vmatpush1.msra.mxu0 %v36
    %102 = vmatprep.subr.mxu0 0.0
    %103 = vmatpush1.msra.mxu0 %v37
    %104 = vmatprep.subr.mxu0 0.0
    %105 = vmatpush1.msra.mxu0 %v38
    %106 = vmatprep.subr.mxu0 0.0
    %107 = vmatpush1.msra.mxu0 %v39
    %108 = vmatprep.subr.mxu0 0.0
    %109 = vmatpush1.msra.mxu0 %v40
    %110 = vmatprep.subr.mxu0 0.0
    %111 = vmatpush1.msra.mxu0 %v41
    %112 = vmatprep.subr.mxu0 0.0
    %113 = vmatpush1.msra.mxu0 %v42
    %114 = vmatprep.subr.mxu0 0.0
    %115 = vmatpush1.msra.mxu0 %v43
    %116 = vmatprep.subr.mxu0 0.0
    %117 = vmatpush1.msra.mxu0 %v44
    %118 = vmatprep.subr.mxu0 0.0
    %119 = vmatpush1.msra.mxu0 %v45
    %120 = vmatprep.subr.mxu0 0.0
    %121 = vmatpush1.msra.mxu0 %v46
    %122 = vmatprep.subr.mxu0 0.0
    %123 = vmatpush1.msra.mxu0 %v47
    %124 = vmatprep.subr.mxu0 0.0
    %125 = vmatpush1.msra.mxu0 %v48
    %126 = vmatprep.subr.mxu0 0.0
    %127 = vmatpush1.msra.mxu0 %v49
    %128 = vmatprep.subr.mxu0 0.0
    %129 = vmatpush1.msra.mxu0 %v50
    %130 = vmatprep.subr.mxu0 0.0
    %131 = vmatpush1.msra.mxu0 %v51
    %132 = vmatprep.subr.mxu0 0.0
    %133 = vmatpush1.msra.mxu0 %v52
    %134 = vmatprep.subr.mxu0 0.0
    %135 = vmatpush1.msra.mxu0 %v53
    %136 = vmatprep.subr.mxu0 0.0
    %137 = vmatpush1.msra.mxu0 %v54
    %138 = vmatprep.subr.mxu0 0.0
    %139 = vmatpush1.msra.mxu0 %v55
    %140 = vmatprep.subr.mxu0 0.0
    %141 = vmatpush1.msra.mxu0 %v56
    %142 = vmatprep.subr.mxu0 0.0
    %143 = vmatpush1.msra.mxu0 %v57
    %144 = vmatprep.subr.mxu0 0.0
    %145 = vmatpush1.msra.mxu0 %v58
    %146 = vmatprep.subr.mxu0 0.0
    %147 = vmatpush1.msra.mxu0 %v59
    %148 = vmatprep.subr.mxu0 0.0
    %149 = vmatpush1.msra.mxu0 %v60
    %150 = vmatprep.subr.mxu0 0.0
    %151 = vmatpush1.msra.mxu0 %v61
    %152 = vmatprep.subr.mxu0 0.0
    %153 = vmatpush1.msra.mxu0 %v62
    %154 = vmatprep.subr.mxu0 0.0
    %155 = vmatpush1.msra.mxu0 %v63
    %156 = vmatprep.subr.mxu0 0.0
    %157 = vmatpush1.msra.mxu0 %v64
    %158 = vmatprep.subr.mxu0 0.0
    %159 = vmatpush1.msra.mxu0 %v65
    %160 = vmatprep.subr.mxu0 0.0
    %161 = vmatpush1.msra.mxu0 %v66
    %162 = vmatprep.subr.mxu0 0.0
    %163 = vmatpush1.msra.mxu0 %v98
    %164 = vmatprep.mubr.f32.mxu0 %v94
    %165 = vmatmul.mubr.f32.gmra.mrb[0].mxu0 %v34
    %v166 = vpop.f32.mrb[0].mxu0
    %v167 = vadd.f32 %v90, %v166
    %v168 = vpop.f32.mrb[0].mxu0
    %169 = vdwg.mxu0
    %v170 = vadd.f32 %v167, 0.0
    %vm171 = vcmp.gt.f32.partialorder %v170, 1.0
    %v172 = vsel %vm171, 1, 0
    %v173 = vcvt.s32.f32 %v172
    %174 = vst [vmem:[#allocation2] sm:$0xff] %v173
    %v175 = vmul.f32 %v170, 0.9
    %v176 = vadd.f32 %v175, %v167
    %v177 = vsub.f32 %v176, %v173
    %vm178 = vcmp.gt.f32.partialorder %v177, 1.0
    %v179 = vsel %vm178, 1, 0
    %v180 = vcvt.s32.f32 %v179
    %181 = vst [vmem:[#allocation2 + $0x8] sm:$0xff] %v180
    %v182 = vmul.f32 %v177, 0.9
    %v183 = vadd.f32 %v182, %v167
    %v184 = vsub.f32 %v183, %v180
    %vm185 = vcmp.gt.f32.partialorder %v184, 1.0
    %v186 = vsel %vm185, 1, 0
    %v187 = vcvt.s32.f32 %v186
    %188 = vst [vmem:[#allocation2 + $0x10] sm:$0xff] %v187
    %v189 = vmul.f32 %v184, 0.9
    %v190 = vadd.f32 %v189, %v167
    %v191 = vsub.f32 %v190, %v187
    %vm192 = vcmp.gt.f32.partialorder %v191, 1.0
    %v193 = vsel %vm192, 1, 0
    %v194 = vcvt.s32.f32 %v193
    %195 = vst [vmem:[#allocation2 + $0x18] sm:$0xff] %v194
    %v196 = vmul.f32 %v191, 0.9
    %v197 = vadd.f32 %v196, %v167
    %v198 = vsub.f32 %v197, %v194
    %vm199 = vcmp.gt.f32.partialorder %v198, 1.0
    %v200 = vsel %vm199, 1, 0
    %v201 = vcvt.s32.f32 %v200
    %202 = vst [vmem:[#allocation2 + $0x20] sm:$0xff] %v201
    %v203 = vmul.f32 %v198, 0.9
    %v204 = vadd.f32 %v203, %v167
    %v205 = vsub.f32 %v204, %v201
    %vm206 = vcmp.gt.f32.partialorder %v205, 1.0
    %v207 = vsel %vm206, 1, 0
    %v208 = vcvt.s32.f32 %v207
    %209 = vst [vmem:[#allocation2 + $0x28] sm:$0xff] %v208
    %v210 = vmul.f32 %v205, 0.9
    %v211 = vadd.f32 %v210, %v167
    %v212 = vsub.f32 %v211, %v208
    %vm213 = vcmp.gt.f32.partialorder %v212, 1.0
    %v214 = vsel %vm213, 1, 0
    %v215 = vcvt.s32.f32 %v214
    %216 = vst [vmem:[#allocation2 + $0x30] sm:$0xff] %v215
    %v217 = vmul.f32 %v212, 0.9
    %v218 = vadd.f32 %v217, %v167
    %v219 = vsub.f32 %v218, %v215
    %vm220 = vcmp.gt.f32.partialorder %v219, 1.0
    %v221 = vsel %vm220, 1, 0
    %v222 = vcvt.s32.f32 %v221
    %223 = vst [vmem:[#allocation2 + $0x38] sm:$0xff] %v222
    %v224 = vmul.f32 %v219, 0.9
    %v225 = vadd.f32 %v224, %v167
    %v226 = vsub.f32 %v225, %v222
    %vm227 = vcmp.gt.f32.partialorder %v226, 1.0
    %v228 = vsel %vm227, 1, 0
    %v229 = vcvt.s32.f32 %v228
    %230 = vst [vmem:[#allocation2 + $0x40] sm:$0xff] %v229
    %v231 = vmul.f32 %v226, 0.9
    %v232 = vadd.f32 %v231, %v167
    %v233 = vsub.f32 %v232, %v229
    %vm234 = vcmp.gt.f32.partialorder %v233, 1.0
    %v235 = vsel %vm234, 1, 0
    %v236 = vcvt.s32.f32 %v235
    %237 = vst [vmem:[#allocation2 + $0x48] sm:$0xff] %v236
    %v238 = vld [vmem:[#allocation2] sm:$0xff]
    %v239 = vld [vmem:[#allocation2 + $0x8] sm:$0xff]
    %v240 = vld [vmem:[#allocation2 + $0x10] sm:$0xff]
    %v241 = vld [vmem:[#allocation2 + $0x18] sm:$0xff]
    %v242 = vld [vmem:[#allocation2 + $0x20] sm:$0xff]
    %v243 = vld [vmem:[#allocation2 + $0x28] sm:$0xff]
    %v244 = vld [vmem:[#allocation2 + $0x30] sm:$0xff]
    %v245 = vld [vmem:[#allocation2 + $0x38] sm:$0xff]
    %v246 = vld [vmem:[#allocation2 + $0x40] sm:$0xff]
    %v247 = vld [vmem:[#allocation2 + $0x48] sm:$0xff]
    %v249 = vlaneseq
    %v250 = vshrl.u32 %v249, 7
    %v251 = vsub.s32 0, %v250
    %v252 = vrot.slane %v85, %v251
    %254 = vmatprep.subr.mxu0 0.0
    %255 = vmatpush1.msra.mxu0 %v69
    %256 = vmatprep.subr.mxu0 0.0
    %257 = vmatpush1.msra.mxu0 %v70
    %258 = vmatprep.subr.mxu0 0.0
    %259 = vmatpush1.msra.mxu0 %v71
    %260 = vmatprep.subr.mxu0 0.0
    %261 = vmatpush1.msra.mxu0 %v72
    %262 = vmatprep.subr.mxu0 0.0
    %263 = vmatpush1.msra.mxu0 %v73
    %264 = vmatprep.subr.mxu0 0.0
    %265 = vmatpush1.msra.mxu0 %v74
    %266 = vmatprep.subr.mxu0 0.0
    %267 = vmatpush1.msra.mxu0 %v75
    %268 = vmatprep.subr.mxu0 0.0
    %269 = vmatpush1.msra.mxu0 %v76
    %270 = vmatprep.subr.mxu0 0.0
    %271 = vmatpush1.msra.mxu0 %v77
    %272 = vmatprep.subr.mxu0 0.0
    %273 = vmatpush1.msra.mxu0 %v78
    %274 = vmatprep.subr.mxu0 0.0
    %275 = vmatpush1.msra.mxu0 %v79
    %276 = vmatprep.subr.mxu0 0.0
    %277 = vmatpush1.msra.mxu0 %v80
    %278 = vmatprep.subr.mxu0 0.0
    %279 = vmatpush1.msra.mxu0 %v81
    %280 = vmatprep.subr.mxu0 0.0
    %281 = vmatpush1.msra.mxu0 %v82
    %282 = vmatprep.subr.mxu0 0.0
    %283 = vmatpush1.msra.mxu0 %v83
    %284 = vmatprep.subr.mxu0 0.0
    %285 = vmatpush1.msra.mxu0 %v84
    %286 = vmatprep.subr.mxu0 0.0
    %287 = vmatpush1.msra.mxu0 0.0
    %288 = vmatprep.subr.mxu0 0.0
    %289 = vmatpush1.msra.mxu0 0.0
    %290 = vmatprep.subr.mxu0 0.0
    %291 = vmatpush1.msra.mxu0 0.0
    %292 = vmatprep.subr.mxu0 0.0
    %293 = vmatpush1.msra.mxu0 0.0
    %294 = vmatprep.subr.mxu0 0.0
    %295 = vmatpush1.msra.mxu0 0.0
    %296 = vmatprep.subr.mxu0 0.0
    %297 = vmatpush1.msra.mxu0 0.0
    %298 = vmatprep.subr.mxu0 0.0
    %299 = vmatpush1.msra.mxu0 0.0
    %300 = vmatprep.subr.mxu0 0.0
    %301 = vmatpush1.msra.mxu0 0.0
    %302 = vmatprep.subr.mxu0 0.0
    %303 = vmatpush1.msra.mxu0 0.0
    %304 = vmatprep.subr.mxu0 0.0
    %305 = vmatpush1.msra.mxu0 0.0
    %306 = vmatprep.subr.mxu0 0.0
    %307 = vmatpush1.msra.mxu0 0.0
    %308 = vmatprep.subr.mxu0 0.0
    %309 = vmatpush1.msra.mxu0 0.0
    %310 = vmatprep.subr.mxu0 0.0
    %311 = vmatpush1.msra.mxu0 0.0
    %312 = vmatprep.subr.mxu0 0.0
    %313 = vmatpush1.msra.mxu0 0.0
    %314 = vmatprep.subr.mxu0 0.0
    %315 = vmatpush1.msra.mxu0 0.0
    %316 = vmatprep.subr.mxu0 0.0
    %317 = vmatpush1.msra.mxu0 0.0
    %318 = vmatprep.mubr.f32.mxu0 0.0
    %319 = vmatmul.mubr.f32.gmra.mrb[0].mxu0 %v238
    %v320 = vpop.f32.mrb[0].mxu0
    %v321 = vadd.f32 %v252, %v320
    %v322 = vpop.f32.mrb[0].mxu0
    %323 = vmatprep.mubr.f32.mxu0 0.0
    %324 = vmatmul.mubr.f32.gmra.mrb[0].mxu0 %v239
    %v325 = vpop.f32.mrb[0].mxu0
    %v326 = vadd.f32 %v252, %v325
    %v327 = vpop.f32.mrb[0].mxu0
    %328 = vmatprep.mubr.f32.mxu0 0.0
    %329 = vmatmul.mubr.f32.gmra.mrb[0].mxu0 %v240
    %v330 = vpop.f32.mrb[0].mxu0
    %v331 = vadd.f32 %v252, %v330
    %v332 = vpop.f32.mrb[0].mxu0
    %333 = vmatprep.mubr.f32.mxu0 0.0
    %334 = vmatmul.mubr.f32.gmra.mrb[0].mxu0 %v241
    %v335 = vpop.f32.mrb[0].mxu0
    %v336 = vadd.f32 %v252, %v335
    %v337 = vpop.f32.mrb[0].mxu0
    %338 = vmatprep.mubr.f32.mxu0 0.0
    %339 = vmatmul.mubr.f32.gmra.mrb[0].mxu0 %v242
    %v340 = vpop.f32.mrb[0].mxu0
    %v341 = vadd.f32 %v252, %v340
    %v342 = vpop.f32.mrb[0].mxu0
    %343 = vmatprep.mubr.f32.mxu0 0.0
    %344 = vmatmul.mubr.f32.gmra.mrb[0].mxu0 %v243
    %v345 = vpop.f32.mrb[0].mxu0
    %v346 = vadd.f32 %v252, %v345
    %v347 = vpop.f32.mrb[0].mxu0
    %348 = vmatprep.mubr.f32.mxu0 0.0
    %349 = vmatmul.mubr.f32.gmra.mrb[0].mxu0 %v244
    %v350 = vpop.f32.mrb[0].mxu0
    %v351 = vadd.f32 %v252, %v350
    %v352 = vpop.f32.mrb[0].mxu0
    %353 = vmatprep.mubr.f32.mxu0 0.0
    %354 = vmatmul.mubr.f32.gmra.mrb[0].mxu0 %v245
    %v355 = vpop.f32.mrb[0].mxu0
    %v356 = vadd.f32 %v252, %v355
    %v357 = vpop.f32.mrb[0].mxu0
    %358 = vmatprep.mubr.f32.mxu0 0.0
    %359 = vmatmul.mubr.f32.gmra.mrb[0].mxu0 %v246
    %v360 = vpop.f32.mrb[0].mxu0
    %v361 = vadd.f32 %v252, %v360
    %v362 = vpop.f32.mrb[0].mxu0
    %363 = vmatprep.mubr.f32.mxu0 0.0
    %364 = vmatmul.mubr.f32.gmra.mrb[0].mxu0 %v247
    %v365 = vpop.f32.mrb[0].mxu0
    %v366 = vadd.f32 %v252, %v365
    %v367 = vpop.f32.mrb[0].mxu0
    %368 = vdwg.mxu0
    %v369 = vadd.f32 %v321, 0.0
    %vm370 = vcmp.gt.f32.partialorder %v369, 1.0
    %v371 = vsel %vm370, 1, 0
    %v372 = vcvt.s32.f32 %v371
    %v373 = vadd.f32 %v372, 0.0
    %v374 = vmul.f32 %v369, 0.9
    %v375 = vadd.f32 %v374, %v326
    %v376 = vsub.f32 %v375, %v372
    %vm377 = vcmp.gt.f32.partialorder %v376, 1.0
    %v378 = vsel %vm377, 1, 0
    %v379 = vcvt.s32.f32 %v378
    %v380 = vadd.f32 %v373, %v379
    %v381 = vmul.f32 %v376, 0.9
    %v382 = vadd.f32 %v381, %v331
    %v383 = vsub.f32 %v382, %v379
    %vm384 = vcmp.gt.f32.partialorder %v383, 1.0
    %v385 = vsel %vm384, 1, 0
    %v386 = vcvt.s32.f32 %v385
    %v387 = vadd.f32 %v380, %v386
    %v388 = vmul.f32 %v383, 0.9
    %v389 = vadd.f32 %v388, %v336
    %v390 = vsub.f32 %v389, %v386
    %vm391 = vcmp.gt.f32.partialorder %v390, 1.0
    %v392 = vsel %vm391, 1, 0
    %v393 = vcvt.s32.f32 %v392
    %v394 = vadd.f32 %v387, %v393
    %v395 = vmul.f32 %v390, 0.9
    %v396 = vadd.f32 %v395, %v341
    %v397 = vsub.f32 %v396, %v393
    %vm398 = vcmp.gt.f32.partialorder %v397, 1.0
    %v399 = vsel %vm398, 1, 0
    %v400 = vcvt.s32.f32 %v399
    %v401 = vadd.f32 %v394, %v400
    %v402 = vmul.f32 %v397, 0.9
    %v403 = vadd.f32 %v402, %v346
    %v404 = vsub.f32 %v403, %v400
    %vm405 = vcmp.gt.f32.partialorder %v404, 1.0
    %v406 = vsel %vm405, 1, 0
    %v407 = vcvt.s32.f32 %v406
    %v408 = vadd.f32 %v401, %v407
    %v409 = vmul.f32 %v404, 0.9
    %v410 = vadd.f32 %v409, %v351
    %v411 = vsub.f32 %v410, %v407
    %vm412 = vcmp.gt.f32.partialorder %v411, 1.0
    %v413 = vsel %vm412, 1, 0
    %v414 = vcvt.s32.f32 %v413
    %v415 = vadd.f32 %v408, %v414
    %v416 = vmul.f32 %v411, 0.9
    %v417 = vadd.f32 %v416, %v356
    %v418 = vsub.f32 %v417, %v414
    %vm419 = vcmp.gt.f32.partialorder %v418, 1.0
    %v420 = vsel %vm419, 1, 0
    %v421 = vcvt.s32.f32 %v420
    %v422 = vadd.f32 %v415, %v421
    %v423 = vmul.f32 %v418, 0.9
    %v424 = vadd.f32 %v423, %v361
    %v425 = vsub.f32 %v424, %v421
    %vm426 = vcmp.gt.f32.partialorder %v425, 1.0
    %v427 = vsel %vm426, 1, 0
    %v428 = vcvt.s32.f32 %v427
    %v429 = vadd.f32 %v422, %v428
    %v430 = vmul.f32 %v425, 0.9
    %v431 = vadd.f32 %v430, %v366
    %v432 = vsub.f32 %v431, %v428
    %vm433 = vcmp.gt.f32.partialorder %v432, 1.0
    %v434 = vsel %vm433, 1, 0
    %v435 = vcvt.s32.f32 %v434
    %v436 = vadd.f32 %v429, %v435
    %vm437 = vcmask 64512
    %438 = vst.msk [vmem:[%s5] sm:$0xff] %vm437, %v436
    // Predicated region
    $region26: #{snn_forward.1} parent=1 // pred_check
      _
    $region27: #{snn_forward.1} parent=1 // pred_check_branch
      %440 = sbr.rel (0) target = $region29
    $region28: #{snn_forward.1} parent=1 // pred_region
      _
    $region29: #{snn_forward.1} parent=1 // pred_fallthru
      _
    // Predicated region
    $region30: #{snn_forward.1} parent=1 // pred_check
      _
    $region31: #{snn_forward.1} parent=1 // pred_check_branch
      %442 = sbr.rel (0) target = $region33
    $region32: #{snn_forward.1} parent=1 // pred_region
      _
    $region33: #{snn_forward.1} parent=1 // pred_fallthru
      _
    %443 = vsyncpa [#allocation4], 1

</llo_original>
